<compile_context>
chip_gen: v7x
topology: tpu7x:2x2x1
jax: 0.10.0
libtpu: 0.0.40
codegen_flags: <defaults>
</compile_context>

<pallas_src>
import functools
from typing import NamedTuple, Optional

import jax
import jax.numpy as jnp
from jax.experimental import pallas as pl
from jax.experimental.pallas import tpu as pltpu


def _round_up(x, m):
    return (x + m - 1) // m * m


def _cdiv(a, b):
    return -(-a // b)


# ---------------------------------------------------------------------------
# Kernel
# ---------------------------------------------------------------------------
def highway_kernel(x_mxu_ref, x_res_ref, w_ref, b_ref, o_ref, *,
                   tile_n, approx_sigmoid):
    # One fused MXU matmul for both branches; f32 accumulation.
    #   w_ref[0] columns are [ W_proj tile | W_gate tile ]  (lane-dense).
    y = jnp.dot(x_mxu_ref[...], w_ref[0],
                preferred_element_type=jnp.float32)
    y = y + b_ref[0].astype(jnp.float32)

    proj = jnp.maximum(y[:, :tile_n], 0.0)          # relu branch
    gate_lin = y[:, tile_n:]
    if approx_sigmoid:
        # EUP-only sigmoid (exp + approximate reciprocal): keeps the divide off
        # the VALU slot when the epilogue, not the MXU, is the bottleneck.
        gate = pl.reciprocal(1.0 + jnp.exp(-gate_lin), approx=True)
    else:
        gate = jax.nn.sigmoid(gate_lin)

    # Residual columns arrive as a dedicated full-precision block (exact skip
    # path even when the MXU feed is bf16).
    x_res = x_res_ref[...].astype(jnp.float32)

    # Highway combine: gate*proj + (1-gate)*x  ==  x + gate*(proj - x)
    out = x_res + gate * (proj - x_res)

    # TODO(synk): nn.Dropout is applied in the PyTorch forward; this emits the
    # eval-mode (identity) path only — training-mode dropout is not implemented.
    o_ref[...] = out.astype(o_ref.dtype)


# ---------------------------------------------------------------------------
# One-time parameter preparation (hoisted out of the per-call path)
# ---------------------------------------------------------------------------
class HighwayParams(NamedTuple):
    w_cat: jax.Array        # (n_tiles, Ep, 2*tile_n), MXU dtype
    b_cat: jax.Array        # (n_tiles, 1, 2*tile_n), f32
    embed_size: int
    padded_embed: int
    tile_n: int


def _pick_tile_n(Ep):
    if Ep <= 2048:
        return Ep                         # both weight branches fully resident
    candidates = (512, 256, 128) if Ep < 4096 else (256, 128)
    for cand in candidates:
        if Ep % cand == 0:
            return cand
    return 128                            # Ep is always a multiple of 128


def make_highway_params(w_proj, b_proj, w_gate, b_gate, *,
                        mxu_dtype: Optional[jnp.dtype] = jnp.bfloat16,
                        tile_n: Optional[int] = None) -> HighwayParams:
    """Fuse and pad the Highway weights once; reuse across forward calls."""
    E = w_proj.shape[0]
    Ep = max(_round_up(E, 128), 128)
    if tile_n is None:
        tile_n = _pick_tile_n(Ep)
    assert Ep % tile_n == 0 and tile_n % 128 == 0
    n_tiles = Ep // tile_n

    wp = jnp.pad(w_proj, ((0, Ep - E), (0, Ep - E)))
    wg = jnp.pad(w_gate, ((0, Ep - E), (0, Ep - E)))
    bp = jnp.pad(b_proj, (0, Ep - E))
    bg = jnp.pad(b_gate, (0, Ep - E))

    # w_cat[j] = [ W_proj[:, j*tn:(j+1)*tn] | W_gate[:, j*tn:(j+1)*tn] ]
    wp_t = wp.reshape(Ep, n_tiles, tile_n)
    wg_t = wg.reshape(Ep, n_tiles, tile_n)
    w_cat = jnp.transpose(jnp.concatenate([wp_t, wg_t], axis=-1), (1, 0, 2))
    if mxu_dtype is not None:
        w_cat = w_cat.astype(mxu_dtype)

    b_cat = jnp.concatenate([bp.reshape(n_tiles, 1, tile_n),
                             bg.reshape(n_tiles, 1, tile_n)],
                            axis=-1).astype(jnp.float32)

    return HighwayParams(w_cat=jax.block_until_ready(w_cat),
                         b_cat=jax.block_until_ready(b_cat),
                         embed_size=E, padded_embed=Ep, tile_n=tile_n)


# ---------------------------------------------------------------------------
# Forward
# ---------------------------------------------------------------------------
def highway_forward(x, params: HighwayParams, *,
                    tile_m=256, approx_sigmoid=False):
    """Highway forward. x: (B, E). Returns (B, E) in x.dtype."""
    B, E = x.shape
    assert E == params.embed_size
    Ep = params.padded_embed
    tile_n = params.tile_n
    n_tiles = Ep // tile_n
    out_dtype = x.dtype
    mxu_dtype = params.w_cat.dtype

    # ---- Row / column tiling -------------------------------------------
    Bp = max(_round_up(B, 8), 8)
    tile_m = min(tile_m, Bp)
    tile_m = _round_up(tile_m, 8)
    # v7x has 2 TensorCores: avoid a 1x1 grid when the batch allows splitting.
    if n_tiles == 1 and _cdiv(Bp, tile_m) == 1 and Bp > 8:
        tile_m = _round_up(_cdiv(Bp, 2), 8)
    n_rows = _cdiv(Bp, tile_m)

    # ---- Pad inputs (rows to sublane multiple, features to lane multiple) --
    if Bp == B and Ep == E:
        xp = x
    else:
        xp = jnp.pad(x, ((0, Bp - B), (0, Ep - E)))
    x_mxu = xp.astype(mxu_dtype) if mxu_dtype != xp.dtype else xp

    # ---- VMEM budget (double-buffered resident set, with headroom) ---------
    mxu_bytes = jnp.dtype(mxu_dtype).itemsize
    res_bytes = jnp.dtype(xp.dtype).itemsize
    out_bytes = jnp.dtype(out_dtype).itemsize
    est = (2 * tile_m * Ep * mxu_bytes           # x MXU-feed block
           + 2 * tile_m * tile_n * res_bytes     # residual columns
           + 2 * Ep * 2 * tile_n * mxu_bytes     # fused weight tile
           + 2 * 2 * tile_n * 4                  # fused bias tile
           + 2 * tile_m * tile_n * out_bytes)    # output tile
    vmem_limit = int(min(96 * 1024 * 1024, max(32 * 1024 * 1024, 2 * est)))

    kernel = functools.partial(highway_kernel, tile_n=tile_n,
                               approx_sigmoid=approx_sigmoid)

    out_padded = pl.pallas_call(
        kernel,
        out_shape=jax.ShapeDtypeStruct((Bp, Ep), out_dtype),
        grid_spec=pltpu.PrefetchScalarGridSpec(
            num_scalar_prefetch=0,
            # Feature tiles OUTER, row blocks INNER: each weight tile is DMA'd
            # from HBM exactly once; only x re-streams per column tile.
            grid=(n_tiles, n_rows),
            in_specs=[
                # x row block (full padded feature dim) for the contraction.
                pl.BlockSpec((tile_m, Ep), lambda j, i: (i, 0)),
                # Full-precision residual columns matching this output tile.
                pl.BlockSpec((tile_m, tile_n), lambda j, i: (i, j)),
                # Fused [proj|gate] weight column tile, invariant in i.
                pl.BlockSpec((1, Ep, 2 * tile_n), lambda j, i: (j, 0, 0)),
                # Fused bias tile.
                pl.BlockSpec((1, 1, 2 * tile_n), lambda j, i: (j, 0, 0)),
            ],
            out_specs=pl.BlockSpec((tile_m, tile_n), lambda j, i: (i, j)),
        ),
        compiler_params=pltpu.CompilerParams(
            dimension_semantics=("parallel", "parallel"),
            vmem_limit_bytes=vmem_limit,
        ),
    )(x_mxu, xp, params.w_cat, params.b_cat)

    if Bp == B and Ep == E:
        return out_padded
    return out_padded[:B, :E]


# ---------------------------------------------------------------------------
# Reference + self-test
# ---------------------------------------------------------------------------
def highway_ref(x, w_proj, b_proj, w_gate, b_gate):
    proj = jax.nn.relu(x @ w_proj + b_proj)
    gate = jax.nn.sigmoid(x @ w_gate + b_gate)
    return gate * proj + (1.0 - gate) * x


if __name__ == "__main__":
    B, E = 8, 32                 # (batch_size, embedding_size)
    dropout_prob = 0.3           # unused at eval time

    key = jax.random.PRNGKey(0)
    kx, kp, kbp, kg, kbg = jax.random.split(key, 5)

    # Deterministic synthetic parameters (module's __init__ only fixes shapes).
    x = jax.random.normal(kx, (B, E), dtype=jnp.float32)
    w_proj = jax.random.normal(kp, (E, E), dtype=jnp.float32) * 0.1
    b_proj = jax.random.normal(kbp, (E,), dtype=jnp.float32) * 0.1
    w_gate = jax.random.normal(kg, (E, E), dtype=jnp.float32) * 0.1
    b_gate = jax.random.normal(kbg, (E,), dtype=jnp.float32) * 0.1

    ref = highway_ref(x, w_proj, b_proj, w_gate, b_gate)

    # Exact f32 MXU path: strict tolerance vs the f32 reference.
    params_f32 = make_highway_params(w_proj, b_proj, w_gate, b_gate,
                                     mxu_dtype=None)
    out_f32 = jax.block_until_ready(highway_forward(x, params_f32))
    assert out_f32.shape == (B, E)
    assert jnp.allclose(out_f32, ref, atol=1e-5, rtol=1e-5), \
        float(jnp.max(jnp.abs(out_f32 - ref)))

    # Default bf16 MXU feed (f32 accumulation, f32 residual): looser tolerance
    # because the matmul operands are rounded to bfloat16.
    params_bf16 = make_highway_params(w_proj, b_proj, w_gate, b_gate)
    out_bf16 = jax.block_until_ready(highway_forward(x, params_bf16))
    assert out_bf16.shape == (B, E)
    assert jnp.allclose(out_bf16, ref, atol=5e-2, rtol=5e-2), \
        float(jnp.max(jnp.abs(out_bf16 - ref)))

    print("KERNEL_OK")
</pallas_src>

<mosaic_0001>
module attributes {stable_mosaic.version = 11 : i64} {
  func.func @highway_kernel(%arg0: i32, %arg1: i32, %arg2: memref<8x128xf32, #tpu.memory_space<vmem>>, %arg3: memref<8x128xf32, #tpu.memory_space<vmem>>, %arg4: memref<1x128x256xf32, #tpu.memory_space<vmem>>, %arg5: memref<1x1x256xf32, #tpu.memory_space<vmem>>, %arg6: memref<8x128xf32, #tpu.memory_space<vmem>>) attributes {dimension_semantics = [#tpu.dimension_semantics<parallel>, #tpu.dimension_semantics<parallel>], iteration_bounds = array<i64: 1, 1>, scalar_prefetch = 0 : i64, scratch_operands = 0 : i64, tpu.core_type = #tpu.core_type<tc>, window_params = [{transform_indices = @transform_0, window_bounds = array<i64: 8, 128>}, {transform_indices = @transform_1, window_bounds = array<i64: 8, 128>}, {transform_indices = @transform_2, window_bounds = array<i64: 1, 128, 256>}, {transform_indices = @transform_3, window_bounds = array<i64: 1, 1, 256>}, {transform_indices = @transform_4, window_bounds = array<i64: 8, 128>}]} {
    %c0 = arith.constant 0 : index
    %c0_0 = arith.constant 0 : index
    %0 = vector.load %arg2[%c0, %c0_0] : memref<8x128xf32, #tpu.memory_space<vmem>>, vector<8x128xf32>
    %c0_1 = arith.constant 0 : index
    %c0_2 = arith.constant 0 : index
    %c0_3 = arith.constant 0 : index
    %1 = vector.load %arg4[%c0_1, %c0_2, %c0_3] : memref<1x128x256xf32, #tpu.memory_space<vmem>>, vector<1x128x256xf32>
    %2 = vector.shape_cast %1 : vector<1x128x256xf32> to vector<128x256xf32>
    %cst = arith.constant dense<0.000000e+00> : vector<8x256xf32>
    %3 = tpu.matmul %0, %2, %cst {dimension_numbers = #tpu.dot_dimension_numbers<[1], [0], [0], [1], [0, 0, 1, 1], [], []>} : vector<8x128xf32>, vector<128x256xf32>, vector<8x256xf32> -> vector<8x256xf32>
    %c0_4 = arith.constant 0 : index
    %c0_5 = arith.constant 0 : index
    %c0_6 = arith.constant 0 : index
    %4 = vector.load %arg5[%c0_4, %c0_5, %c0_6] : memref<1x1x256xf32, #tpu.memory_space<vmem>>, vector<1x1x256xf32>
    %5 = vector.shape_cast %4 : vector<1x1x256xf32> to vector<1x256xf32>
    %6 = vector.broadcast %5 : vector<1x256xf32> to vector<8x256xf32>
    %7 = arith.addf %3, %6 : vector<8x256xf32>
    %8 = vector.extract_strided_slice %7 {offsets = [0, 0], sizes = [8, 128], strides = [1, 1]} : vector<8x256xf32> to vector<8x128xf32>
    %cst_7 = arith.constant 0.000000e+00 : f32
    %9 = vector.broadcast %cst_7 : f32 to vector<8x128xf32>
    %10 = arith.maximumf %8, %9 : vector<8x128xf32>
    %11 = vector.extract_strided_slice %7 {offsets = [0, 128], sizes = [8, 128], strides = [1, 1]} : vector<8x256xf32> to vector<8x128xf32>
    %12 = arith.negf %11 : vector<8x128xf32>
    %13 = math.exp %12 : vector<8x128xf32>
    %cst_8 = arith.constant 1.000000e+00 : f32
    %14 = vector.broadcast %cst_8 : f32 to vector<8x128xf32>
    %15 = arith.addf %14, %13 : vector<8x128xf32>
    %16 = arith.divf %14, %15 : vector<8x128xf32>
    %c0_9 = arith.constant 0 : index
    %c0_10 = arith.constant 0 : index
    %17 = vector.load %arg3[%c0_9, %c0_10] : memref<8x128xf32, #tpu.memory_space<vmem>>, vector<8x128xf32>
    %18 = arith.subf %10, %17 : vector<8x128xf32>
    %19 = arith.mulf %16, %18 : vector<8x128xf32>
    %20 = arith.addf %17, %19 : vector<8x128xf32>
    %c0_11 = arith.constant 0 : index
    %c0_12 = arith.constant 0 : index
    %21 = vector.load %arg6[%c0_11, %c0_12] : memref<8x128xf32, #tpu.memory_space<vmem>>, vector<8x128xf32>
    tpu.vector_store %arg6[%c0_11, %c0_12], %20 {strides = array<i32>} : memref<8x128xf32, #tpu.memory_space<vmem>>, vector<8x128xf32>,
    return
  }
  func.func @transform_0(%arg0: i32, %arg1: i32) -> (i32, i32) {
    %c0_i32 = arith.constant 0 : i32
    %c0_i32_0 = arith.constant 0 : i32
    return %arg1, %c0_i32 : i32, i32
  }
  func.func @transform_1(%arg0: i32, %arg1: i32) -> (i32, i32) {
    %c0_i32 = arith.constant 0 : i32
    return %arg1, %arg0 : i32, i32
  }
  func.func @transform_2(%arg0: i32, %arg1: i32) -> (i32, i32, i32) {
    %c0_i32 = arith.constant 0 : i32
    %c0_i32_0 = arith.constant 0 : i32
    %c0_i32_1 = arith.constant 0 : i32
    return %arg0, %c0_i32, %c0_i32_0 : i32, i32, i32
  }
  func.func @transform_3(%arg0: i32, %arg1: i32) -> (i32, i32, i32) {
    %c0_i32 = arith.constant 0 : i32
    %c0_i32_0 = arith.constant 0 : i32
    %c0_i32_1 = arith.constant 0 : i32
    return %arg0, %c0_i32, %c0_i32_0 : i32, i32, i32
  }
  func.func @transform_4(%arg0: i32, %arg1: i32) -> (i32, i32) {
    %c0_i32 = arith.constant 0 : i32
    return %arg1, %arg0 : i32, i32
  }
}

</mosaic_0001>

<llo_original>
// kernel: tpu_custom_call.1
$region0: #{tpu_custom_call.1}
  #allocation0 [shape = 'u32[]', space=smem, size = 0x4, offset = 0x4, fixed_abs, tag = 'smem constant byte address 0x4 - core index']
  #allocation1 [shape = 'u32[144,128]{1,0:T(1,128)}', space=vmem, size = 0x12000, scoped, tag = 'internal scratch']
  %s0 = inlined_call_operand.hbm [shape: f32[8,128], index: 0, kind: input, shape index: {}]
  %s1 = inlined_call_operand.hbm [shape: f32[8,128], index: 1, kind: input, shape index: {}]
  %s2 = inlined_call_operand.hbm [shape: f32[1,128,256], index: 2, kind: input, shape index: {}]
  %s3 = inlined_call_operand.vmem [shape: f32[1,1,256], index: 3, kind: input, shape index: {}]
  %s4 = inlined_call_operand.hbm [shape: f32[8,128], index: 4, kind: output, shape index: {}]
  %s5 = sld [smem:[#allocation0]]
  $region38: #{tpu_custom_call.1} parent=0
    _
  %s7 = ssub.s32 1, %s5
  %s8 = scalar_select 0, %s7, %s5
  $region1: #{tpu_custom_call.1} parent=0
    #allocation2 [shape = 'u8[4096]{0}', space=vmem, size = 0x1000, scoped, tag = 'input window, operand 0, single buffered']
    #allocation3 [shape = 's32[1]{0}', space=sflag, size = 0x4, scoped, tag = 'scoped memory for tpu_custom_call.1']
    #allocation4 [shape = 's32[1]{0}', space=sflag, size = 0x4, scoped, tag = 'scoped memory for tpu_custom_call.1']
    #allocation5 [shape = 'u8[4096]{0}', space=vmem, size = 0x1000, scoped, tag = 'input window, operand 1, single buffered']
    #allocation6 [shape = 's32[1]{0}', space=sflag, size = 0x4, scoped, tag = 'scoped memory for tpu_custom_call.1']
    #allocation7 [shape = 'u8[131072]{0}', space=vmem, size = 0x20000, scoped, tag = 'input window, operand 2, single buffered']
    #allocation8 [shape = 'u8[4096]{0}', space=vmem, size = 0x1000, scoped, tag = 'output window, operand 0, single buffered']
    %9 = vsyncpa [#allocation3], 0
    %10 = vsyncpa [#allocation6], 0
    %11 = vsyncpa [#allocation4], 0
    // Predicated region
    $region2: #{tpu_custom_call.1} parent=1 // pred_check
      _
    $region3: #{tpu_custom_call.1} parent=1 // pred_check_branch
      %13 = sbr.rel (0) target = $region5
    $region4: #{tpu_custom_call.1} parent=1 // pred_region
      %s15 = ssub.s32 128, 128
      %16 = vsyncadd [#allocation3], %s15
      %s18 = sshll.u32 [#allocation2], 4
      %s19 = int_to_ptr.vmem [resolvable:$true] %s18
      %21 = dma.hbm_to_vmem [thread:$0]  %s0, 128, %s19, [#allocation3]
    $region5: #{tpu_custom_call.1} parent=1 // pred_fallthru
      _
    // Predicated region
    $region6: #{tpu_custom_call.1} parent=1 // pred_check
      _
    $region7: #{tpu_custom_call.1} parent=1 // pred_check_branch
      %23 = sbr.rel (0) target = $region9
    $region8: #{tpu_custom_call.1} parent=1 // pred_region
      %s25 = ssub.s32 128, 128
      %26 = vsyncadd [#allocation6], %s25
      %s28 = sshll.u32 [#allocation5], 4
      %s29 = int_to_ptr.vmem [resolvable:$true] %s28
      %31 = dma.hbm_to_vmem [thread:$0]  %s1, 128, %s29, [#allocation6]
    $region9: #{tpu_custom_call.1} parent=1 // pred_fallthru
      _
    // Predicated region
    $region10: #{tpu_custom_call.1} parent=1 // pred_check
      _
    $region11: #{tpu_custom_call.1} parent=1 // pred_check_branch
      %33 = sbr.rel (0) target = $region13
    $region12: #{tpu_custom_call.1} parent=1 // pred_region
      %s35 = ssub.s32 4096, 4096
      %36 = vsyncadd [#allocation6], %s35
      %s37 = sshll.u32 [#allocation7], 4
      %s38 = int_to_ptr.vmem [resolvable:$true] %s37
      %43 = dma.hbm_to_vmem [thread:$0]  %s2, 4096, %s38, [#allocation6], 256, 256, 16
    $region13: #{tpu_custom_call.1} parent=1 // pred_fallthru
      _
    // Predicated region
    $region14: #{tpu_custom_call.1} parent=1 // pred_check
      _
    $region15: #{tpu_custom_call.1} parent=1 // pred_check_branch
      %45 = sbr.rel (0) target = $region17
    $region16: #{tpu_custom_call.1} parent=1 // pred_region
      _
    $region17: #{tpu_custom_call.1} parent=1 // pred_fallthru
      _
    // Predicated region
    $region18: #{tpu_custom_call.1} parent=1 // pred_check
      _
    $region19: #{tpu_custom_call.1} parent=1 // pred_check_branch
      %47 = sbr.rel (0) target = $region21
    $region20: #{tpu_custom_call.1} parent=1 // pred_region
      %48 = dma.done [#allocation3], 128
    $region21: #{tpu_custom_call.1} parent=1 // pred_fallthru
      _
    // Predicated region
    $region22: #{tpu_custom_call.1} parent=1 // pred_check
      _
    $region23: #{tpu_custom_call.1} parent=1 // pred_check_branch
      %50 = sbr.rel (0) target = $region25
    $region24: #{tpu_custom_call.1} parent=1 // pred_region
      %51 = dma.done [#allocation6], 128
    $region25: #{tpu_custom_call.1} parent=1 // pred_fallthru
      _
    // Predicated region
    $region26: #{tpu_custom_call.1} parent=1 // pred_check
      _
    $region27: #{tpu_custom_call.1} parent=1 // pred_check_branch
      %53 = sbr.rel (0) target = $region29
    $region28: #{tpu_custom_call.1} parent=1 // pred_region
      %54 = dma.done [#allocation6], 4096
    $region29: #{tpu_custom_call.1} parent=1 // pred_fallthru
      _
    %v55 = vld [vmem:[#allocation2] sm:$0xff]
    %v56 = vld [vmem:[#allocation7] sm:$0xff]
    %v57 = vld [vmem:[#allocation7 + $0x8] sm:$0xff]
    %v58 = vld [vmem:[#allocation7 + $0x10] sm:$0xff]
    %v59 = vld [vmem:[#allocation7 + $0x18] sm:$0xff]
    %v60 = vld [vmem:[#allocation7 + $0x20] sm:$0xff]
    %v61 = vld [vmem:[#allocation7 + $0x28] sm:$0xff]
    %v62 = vld [vmem:[#allocation7 + $0x30] sm:$0xff]
    %v63 = vld [vmem:[#allocation7 + $0x38] sm:$0xff]
    %v64 = vld [vmem:[#allocation7 + $0x40] sm:$0xff]
    %v65 = vld [vmem:[#allocation7 + $0x48] sm:$0xff]
    %v66 = vld [vmem:[#allocation7 + $0x50] sm:$0xff]
    %v67 = vld [vmem:[#allocation7 + $0x58] sm:$0xff]
    %v68 = vld [vmem:[#allocation7 + $0x60] sm:$0xff]
    %v69 = vld [vmem:[#allocation7 + $0x68] sm:$0xff]
    %v70 = vld [vmem:[#allocation7 + $0x70] sm:$0xff]
    %v71 = vld [vmem:[#allocation7 + $0x78] sm:$0xff]
    %v72 = vld [vmem:[#allocation7 + $0x80] sm:$0xff]
    %v73 = vld [vmem:[#allocation7 + $0x88] sm:$0xff]
    %v74 = vld [vmem:[#allocation7 + $0x90] sm:$0xff]
    %v75 = vld [vmem:[#allocation7 + $0x98] sm:$0xff]
    %v76 = vld [vmem:[#allocation7 + $0xa0] sm:$0xff]
    %v77 = vld [vmem:[#allocation7 + $0xa8] sm:$0xff]
    %v78 = vld [vmem:[#allocation7 + $0xb0] sm:$0xff]
    %v79 = vld [vmem:[#allocation7 + $0xb8] sm:$0xff]
    %v80 = vld [vmem:[#allocation7 + $0xc0] sm:$0xff]
    %v81 = vld [vmem:[#allocation7 + $0xc8] sm:$0xff]
    %v82 = vld [vmem:[#allocation7 + $0xd0] sm:$0xff]
    %v83 = vld [vmem:[#allocation7 + $0xd8] sm:$0xff]
    %v84 = vld [vmem:[#allocation7 + $0xe0] sm:$0xff]
    %v85 = vld [vmem:[#allocation7 + $0xe8] sm:$0xff]
    %v86 = vld [vmem:[#allocation7 + $0xf0] sm:$0xff]
    %v87 = vld [vmem:[#allocation7 + $0xf8] sm:$0xff]
    %v88 = vld [vmem:[%s3] sm:$0x3]
    %v90 = vlaneseq
    %v91 = vshrl.u32 %v90, 7
    %v92 = vsub.s32 0, %v91
    %v93 = vrot.slane %v88, %v92
    %v94 = vlaneseq
    %v95 = vshrl.u32 %v94, 7
    %v96 = vsub.s32 1, %v95
    %v97 = vrot.slane %v88, %v96
    %100 = vmatprep.subr.mxu0 %v57
    %101 = vmatpush1.msra.mxu0 %v56
    %102 = vmatprep.subr.mxu0 %v59
    %103 = vmatpush1.msra.mxu0 %v58
    %104 = vmatprep.subr.mxu0 %v61
    %105 = vmatpush1.msra.mxu0 %v60
    %106 = vmatprep.subr.mxu0 %v63
    %107 = vmatpush1.msra.mxu0 %v62
    %108 = vmatprep.subr.mxu0 %v65
    %109 = vmatpush1.msra.mxu0 %v64
    %110 = vmatprep.subr.mxu0 %v67
    %111 = vmatpush1.msra.mxu0 %v66
    %112 = vmatprep.subr.mxu0 %v69
    %113 = vmatpush1.msra.mxu0 %v68
    %114 = vmatprep.subr.mxu0 %v71
    %115 = vmatpush1.msra.mxu0 %v70
    %116 = vmatprep.subr.mxu0 %v73
    %117 = vmatpush1.msra.mxu0 %v72
    %118 = vmatprep.subr.mxu0 %v75
    %119 = vmatpush1.msra.mxu0 %v74
    %120 = vmatprep.subr.mxu0 %v77
    %121 = vmatpush1.msra.mxu0 %v76
    %122 = vmatprep.subr.mxu0 %v79
    %123 = vmatpush1.msra.mxu0 %v78
    %124 = vmatprep.subr.mxu0 %v81
    %125 = vmatpush1.msra.mxu0 %v80
    %126 = vmatprep.subr.mxu0 %v83
    %127 = vmatpush1.msra.mxu0 %v82
    %128 = vmatprep.subr.mxu0 %v85
    %129 = vmatpush1.msra.mxu0 %v84
    %130 = vmatprep.subr.mxu0 %v87
    %131 = vmatpush1.msra.mxu0 %v86
    %132 = vmatprep.subr.mxu0 0.0
    %133 = vmatpush1.msra.mxu0 0.0
    %134 = vmatprep.subr.mxu0 0.0
    %135 = vmatpush1.msra.mxu0 0.0
    %136 = vmatprep.subr.mxu0 0.0
    %137 = vmatpush1.msra.mxu0 0.0
    %138 = vmatprep.subr.mxu0 0.0
    %139 = vmatpush1.msra.mxu0 0.0
    %140 = vmatprep.subr.mxu0 0.0
    %141 = vmatpush1.msra.mxu0 0.0
    %142 = vmatprep.subr.mxu0 0.0
    %143 = vmatpush1.msra.mxu0 0.0
    %144 = vmatprep.subr.mxu0 0.0
    %145 = vmatpush1.msra.mxu0 0.0
    %146 = vmatprep.subr.mxu0 0.0
    %147 = vmatpush1.msra.mxu0 0.0
    %148 = vmatprep.subr.mxu0 0.0
    %149 = vmatpush1.msra.mxu0 0.0
    %150 = vmatprep.subr.mxu0 0.0
    %151 = vmatpush1.msra.mxu0 0.0
    %152 = vmatprep.subr.mxu0 0.0
    %153 = vmatpush1.msra.mxu0 0.0
    %154 = vmatprep.subr.mxu0 0.0
    %155 = vmatpush1.msra.mxu0 0.0
    %156 = vmatprep.subr.mxu0 0.0
    %157 = vmatpush1.msra.mxu0 0.0
    %158 = vmatprep.subr.mxu0 0.0
    %159 = vmatpush1.msra.mxu0 0.0
    %160 = vmatprep.subr.mxu0 0.0
    %161 = vmatpush1.msra.mxu0 0.0
    %162 = vmatprep.subr.mxu0 0.0
    %163 = vmatpush1.msra.mxu0 0.0
    %164 = vmatprep.mubr.f32.mxu0 0.0
    %165 = vmatmul.mubr.f32.gmra.mrb[0].mxu0 %v55
    %v166 = vpop.f32.mrb[0].mxu0
    %v167 = vadd.f32 %v93, %v166
    %v168 = vpop.f32.mrb[0].mxu0
    %v169 = vadd.f32 %v97, %v168
    %170 = vdwg.mxu0
    %v171 = vmax.f32 %v167, 0.0
    %v172 = vxor.u32 %v169, 2147483648
    %v173 = vmul.f32 %v172, 1.442695
    %v174 = vpow.pop %v173
    %v175 = vadd.f32 %v174, 1.0
    %v176 = vrcp.pop %v175
    %v177 = vmul.f32 1.0, %v176
    %v178 = vld [vmem:[#allocation5] sm:$0xff]
    %v179 = vsub.f32 %v171, %v178
    %v180 = vmul.f32 %v177, %v179
    %v181 = vadd.f32 %v178, %v180
    %182 = vst [vmem:[#allocation8] sm:$0xff] %v181
    // Predicated region
    $region30: #{tpu_custom_call.1} parent=1 // pred_check
      _
    $region31: #{tpu_custom_call.1} parent=1 // pred_check_branch
      %184 = sbr.rel (0) target = $region33
    $region32: #{tpu_custom_call.1} parent=1 // pred_region
      %s186 = ssub.s32 128, 128
      %187 = vsyncadd [#allocation4], %s186
      %s189 = sshll.u32 [#allocation8], 4
      %s190 = int_to_ptr.vmem [resolvable:$true] %s189
      %192 = dma.vmem_to_hbm [thread:$0]  %s190, 128, %s4, [#allocation4]
    $region33: #{tpu_custom_call.1} parent=1 // pred_fallthru
      _
    // Predicated region
    $region34: #{tpu_custom_call.1} parent=1 // pred_check
      _
    $region35: #{tpu_custom_call.1} parent=1 // pred_check_branch
      %194 = sbr.rel (0) target = $region37
    $region36: #{tpu_custom_call.1} parent=1 // pred_region
      %195 = dma.done [#allocation4], 128
    $region37: #{tpu_custom_call.1} parent=1 // pred_fallthru
      _
    %196 = vsyncpa [#allocation3], 1
    %197 = vsyncpa [#allocation6], 1
    %198 = vsyncpa [#allocation4], 1

</llo_original>
